<compile_context>
chip_gen: v7x
topology: tpu7x:2x2x1
jax: 0.10.0
libtpu: 0.0.40
codegen_flags: <defaults>
</compile_context>

<pallas_src>
import functools

import jax
import jax.numpy as jnp
from jax import lax
from jax.experimental import pallas as pl
from jax.experimental.pallas import tpu as pltpu


def _round_up(x, m):
    return (x + m - 1) // m * m


def _atloss_kernel(logits_ref, labels_ref, out_ref, *, n_rows, tile_n):
    """One row-block of the ATLoss.

    Computes sum over valid rows of (loss1 + loss2) for this block and writes it
    (broadcast) into a lane-dense (1, 8, 128) output slab. The wrapper finishes
    the global sum and the mean.
    """
    i = pl.program_id(0)

    # Upcast inside the kernel (inputs may be bf16 / int8 / bool).
    logits = logits_ref[...].astype(jnp.float32)          # (TN, C)
    labels = labels_ref[...].astype(jnp.float32)          # (TN, C)

    col = lax.broadcasted_iota(jnp.int32, logits.shape, 1)
    not_col0 = col != 0
    # Threshold column (col 0) never counts as a positive label.
    pos = jnp.logical_and(labels > 0.0, not_col0)

    # One shared row-max and one shared exp pass feed both log-sum-exps.
    m = jnp.max(logits, axis=-1, keepdims=True)            # (TN, 1)
    e = jnp.exp(logits - m)                                 # (TN, C), single EUP pass
    e0 = e[:, :1]                                           # exp(logits[:, 0] - m)
    sum_pos = jnp.sum(jnp.where(pos, e, 0.0), axis=-1, keepdims=True)
    sum_neg = jnp.sum(jnp.where(pos, 0.0, e), axis=-1, keepdims=True)  # incl. col 0

    lse1 = m + jnp.log(sum_pos + e0)   # LSE over {positives} ∪ {threshold col}
    lse2 = m + jnp.log(sum_neg)        # LSE over {non-positives} (threshold kept)

    # loss1 = -sum_j labels * log_softmax(logit1); labels are nonzero only where
    # logit1 == logits, so (logits - lse1) is exact there.
    lab1 = jnp.where(pos, labels, 0.0)
    loss1 = -jnp.sum((logits - lse1) * lab1, axis=-1, keepdims=True)
    # loss2 = -log_softmax(logit2)[:, 0]  (th_label hits only col 0, never masked).
    loss2 = lse2 - logits[:, :1]

    loss_rows = loss1 + loss2                               # (TN, 1)

    # Discard garbage rows of the partial last block via a select BEFORE any
    # cross-row reduction (NaN/Inf from unspecified data cannot propagate).
    row = lax.broadcasted_iota(jnp.int32, loss_rows.shape, 0) + i * tile_n
    loss_rows = jnp.where(row < n_rows, loss_rows, 0.0)

    block_total = jnp.sum(loss_rows)

    # Lane-dense, unmasked full-width store of this block's partial sum.
    out_ref[...] = jnp.broadcast_to(block_total, out_ref.shape).astype(jnp.float32)


def atloss_pallas(logits, labels, *, max_tile_n=1024):
    """ATLoss.forward implemented with a Pallas TPU kernel. Returns scalar mean loss."""
    n, c = logits.shape
    assert labels.shape == (n, c), (labels.shape, (n, c))

    it_logits = jnp.dtype(logits.dtype).itemsize
    it_labels = jnp.dtype(labels.dtype).itemsize
    c_pad = _round_up(c, 128)                  # lane padding counts toward VMEM

    # Per-generation VMEM budget (v7x: 64 MiB physical vs 128 MiB on v5e/v6e).
    try:
        vmem_cap = int(getattr(pltpu.get_tpu_info(), "vmem_capacity_bytes",
                               64 * 1024 * 1024))
    except Exception:  # pragma: no cover - conservative fallback off-TPU
        vmem_cap = 64 * 1024 * 1024
    budget = min(vmem_cap // 4, 16 * 1024 * 1024)

    # Deeper pipelining only pays off for short per-block DMAs (small C).
    want_extra_buffer = c_pad <= 256
    plan_buffers = 3 if want_extra_buffer else 2

    # Bytes per tile row: both inputs x pipeline buffers (actual itemsizes,
    # lane-padded) + ~6 f32 intermediates of shape (tile_n, c_pad).
    per_row = plan_buffers * c_pad * (it_logits + it_labels) + 6 * c_pad * 4
    max_rows = max(8, (budget // per_row) // 8 * 8)
    tile_n = min(max_tile_n, max_rows, _round_up(n, 8))

    # Guarantee >= 2 grid blocks so the "parallel" axis can span both v7x cores.
    if n > 8 and pl.cdiv(n, tile_n) < 2:
        tile_n = max(8, _round_up(pl.cdiv(n, 2), 8))

    num_blocks = pl.cdiv(n, tile_n)            # partial last block handled in-kernel

    use_extra_buffer = (want_extra_buffer and num_blocks >= 4
                        and hasattr(pl, "Buffered"))

    def _in_spec():
        if use_extra_buffer:
            return pl.BlockSpec((tile_n, c), lambda i: (i, 0),
                                pipeline_mode=pl.Buffered(3))
        return pl.BlockSpec((tile_n, c), lambda i: (i, 0))

    kernel = functools.partial(_atloss_kernel, n_rows=n, tile_n=tile_n)

    buffers_used = 3 if use_extra_buffer else 2
    vmem_est = (buffers_used * tile_n * c_pad * (it_logits + it_labels)
                + 6 * tile_n * c_pad * 4
                + 2 * 8 * 128 * 4)
    vmem_limit = int(min(max(2 * vmem_est, 16 * 1024 * 1024),
                         max(vmem_cap // 2, 16 * 1024 * 1024)))

    bytes_in = n * c * (it_logits + it_labels)
    cost = pl.CostEstimate(
        flops=12 * n * c,
        transcendentals=n * c + 2 * n,
        bytes_accessed=bytes_in + num_blocks * 8 * 128 * 4,
    )

    partials = pl.pallas_call(
        kernel,
        out_shape=jax.ShapeDtypeStruct((num_blocks, 8, 128), jnp.float32),
        grid_spec=pltpu.PrefetchScalarGridSpec(
            num_scalar_prefetch=0,
            grid=(num_blocks,),
            in_specs=[_in_spec(), _in_spec()],
            out_specs=pl.BlockSpec((1, 8, 128), lambda i: (i, 0, 0)),
        ),
        compiler_params=pltpu.CompilerParams(
            dimension_semantics=("parallel",),
            vmem_limit_bytes=vmem_limit,
        ),
        cost_estimate=cost,
    )(logits, labels)

    # Finish the reduction (one element per block) and the mean in the wrapper.
    return jnp.sum(partials[:, 0, 0]) / jnp.float32(n)


class JointLossPallas:
    """JAX/Pallas port of JointLoss. rule_weight is a plain Python float."""

    def __init__(self, rule_weight):
        self.rule_weight = rule_weight
        self.current_epoch = 0

    def __call__(self, relation_logits, labels, rule_loss=None,
                 generated_rules=None, mode="train"):
        labels_tensor = self._prepare_labels(labels)
        atlop_loss = atloss_pallas(relation_logits, labels_tensor)
        current_rule_weight = self.rule_weight

        if rule_loss is not None and mode == "train":
            total_loss = atlop_loss + current_rule_weight * rule_loss
        else:
            total_loss = atlop_loss
            if rule_loss is None:
                rule_loss = jnp.float32(0.0)

        loss_dict = {
            "total_loss": total_loss,
            "atlop_loss": atlop_loss,
            "rule_loss": rule_loss,
            "rule_weight": current_rule_weight,
            "rule_contribution": current_rule_weight * rule_loss
            if rule_loss is not None else 0.0,
        }
        return loss_dict

    @staticmethod
    def _prepare_labels(labels):
        # Keep the incoming dtype (bf16 / int8 / bool labels halve or quarter the
        # HBM bytes on this HBM-bound kernel); the kernel upcasts to f32
        # internally, matching .float() in the PyTorch reference numerically.
        if isinstance(labels, (list, tuple)):
            parts = [jnp.asarray(p) for p in labels]
            return jnp.concatenate(parts, axis=0)
        return jnp.asarray(labels)

    def set_rule_weight(self, weight):
        self.rule_weight = weight


def _atloss_ref(logits, labels):
    """Pure-JAX reference for validation (mirrors PyTorch ATLoss.forward)."""
    logits = logits.astype(jnp.float32)
    labels = labels.astype(jnp.float32)
    th_label = jnp.zeros_like(labels).at[:, 0].set(1.0)
    labels = labels.at[:, 0].set(0.0)
    p_mask = labels + th_label
    n_mask = 1.0 - labels
    logit1 = logits - (1.0 - p_mask) * 1e30
    logit2 = logits - (1.0 - n_mask) * 1e30
    loss1 = -jnp.sum(jax.nn.log_softmax(logit1, axis=-1) * labels, axis=1)
    loss2 = -jnp.sum(jax.nn.log_softmax(logit2, axis=-1) * th_label, axis=1)
    return jnp.mean(loss1 + loss2)


# TODO(synk): ATLoss.get_label (inference-time thresholding helper) and the
# host-side _compute_rule_statistics are not part of the forward loss and are
# not ported to Pallas.

if __name__ == "__main__":
    key = jax.random.PRNGKey(0)
    k1, k2, k3, k4, k5, k6 = jax.random.split(key, 6)

    # 16 entity-pair examples, 16 relation classes (column 0 = threshold class).
    N, C = 16, 16
    relation_logits = jax.random.normal(k1, (N, C), dtype=jnp.float32)
    labels = (jax.random.uniform(k2, (N, C)) < 0.2).astype(jnp.float32)
    rule_loss = jnp.float32(0.5)

    joint = JointLossPallas(rule_weight=0.3)
    loss_dict = joint(relation_logits, labels, rule_loss=rule_loss, mode="train")
    total = jax.block_until_ready(loss_dict["total_loss"])
    ref_total = _atloss_ref(relation_logits, labels) + 0.3 * rule_loss
    assert jnp.allclose(total, ref_total, rtol=1e-5, atol=1e-5), (total, ref_total)

    # Ragged N (not a multiple of the tile): exercises the partial last block
    # (no jnp.pad copy anymore).
    N2, C2 = 13, 16
    logits2 = jax.random.normal(k3, (N2, C2), dtype=jnp.float32)
    labels2 = (jax.random.uniform(k4, (N2, C2)) < 0.3).astype(jnp.float32)
    out2 = jax.block_until_ready(atloss_pallas(logits2, labels2))
    ref2 = _atloss_ref(logits2, labels2)
    assert jnp.allclose(out2, ref2, rtol=1e-5, atol=1e-5), (out2, ref2)

    # Non-power-of-two class count + multi-block grid + partial last block.
    N3, C3 = 200, 97
    logits3 = jax.random.normal(k5, (N3, C3), dtype=jnp.float32)
    labels3 = (jax.random.uniform(k6, (N3, C3)) < 0.1).astype(jnp.float32)
    out3 = jax.block_until_ready(atloss_pallas(logits3, labels3))
    ref3 = _atloss_ref(logits3, labels3)
    assert jnp.allclose(out3, ref3, rtol=1e-5, atol=1e-5), (out3, ref3)

    print("KERNEL_OK")
</pallas_src>

<mosaic_0001>
module attributes {stable_mosaic.version = 11 : i64} {
  func.func @_atloss_kernel(%arg0: i32, %arg1: memref<8x16xf32, #tpu.memory_space<vmem>>, %arg2: memref<8x16xf32, #tpu.memory_space<vmem>>, %arg3: memref<1x8x128xf32, #tpu.memory_space<vmem>>) attributes {dimension_semantics = [#tpu.dimension_semantics<parallel>], iteration_bounds = array<i64: 2>, scalar_prefetch = 0 : i64, scratch_operands = 0 : i64, tpu.core_type = #tpu.core_type<tc>, window_params = [{transform_indices = @transform_0, window_bounds = array<i64: 8, 16>}, {transform_indices = @transform_1, window_bounds = array<i64: 8, 16>}, {transform_indices = @transform_2, window_bounds = array<i64: 1, 8, 128>}]} {
    %c0 = arith.constant 0 : index
    %c0_0 = arith.constant 0 : index
    %0 = vector.load %arg1[%c0, %c0_0] : memref<8x16xf32, #tpu.memory_space<vmem>>, vector<8x16xf32>
    %c0_1 = arith.constant 0 : index
    %c0_2 = arith.constant 0 : index
    %1 = vector.load %arg2[%c0_1, %c0_2] : memref<8x16xf32, #tpu.memory_space<vmem>>, vector<8x16xf32>
    %2 = tpu.iota {dimensions = array<i32: 1>} : vector<8x16xi32>
    %c0_i32 = arith.constant 0 : i32
    %3 = vector.broadcast %c0_i32 : i32 to vector<8x16xi32>
    %4 = arith.cmpi ne, %2, %3 : vector<8x16xi32>
    %cst = arith.constant 0.000000e+00 : f32
    %5 = vector.broadcast %cst : f32 to vector<8x16xf32>
    %6 = arith.cmpf ogt, %1, %5 : vector<8x16xf32>
    %7 = arith.andi %6, %4 : vector<8x16xi1>
    %cst_3 = arith.constant dense<0xFF800000> : vector<8xf32>
    %8 = vector.multi_reduction <maximumf>, %0, %cst_3 [1] : vector<8x16xf32> to vector<8xf32>
    %9 = vector.shape_cast %8 : vector<8xf32> to vector<8x1xf32>
    %10 = vector.broadcast %9 : vector<8x1xf32> to vector<8x16xf32>
    %11 = arith.subf %0, %10 : vector<8x16xf32>
    %12 = math.exp %11 : vector<8x16xf32>
    %13 = vector.extract_strided_slice %12 {offsets = [0, 0], sizes = [8, 1], strides = [1, 1]} : vector<8x16xf32> to vector<8x1xf32>
    %cst_4 = arith.constant 0.000000e+00 : f32
    %14 = vector.broadcast %cst_4 : f32 to vector<8x16xf32>
    %15 = arith.select %7, %12, %14 : vector<8x16xi1>, vector<8x16xf32>
    %cst_5 = arith.constant dense<0.000000e+00> : vector<8xf32>
    %16 = vector.multi_reduction <add>, %15, %cst_5 [1] : vector<8x16xf32> to vector<8xf32>
    %17 = vector.shape_cast %16 : vector<8xf32> to vector<8x1xf32>
    %cst_6 = arith.constant 0.000000e+00 : f32
    %18 = vector.broadcast %cst_6 : f32 to vector<8x16xf32>
    %19 = arith.select %7, %18, %12 : vector<8x16xi1>, vector<8x16xf32>
    %cst_7 = arith.constant dense<0.000000e+00> : vector<8xf32>
    %20 = vector.multi_reduction <add>, %19, %cst_7 [1] : vector<8x16xf32> to vector<8xf32>
    %21 = vector.shape_cast %20 : vector<8xf32> to vector<8x1xf32>
    %22 = arith.addf %17, %13 : vector<8x1xf32>
    %23 = math.log %22 : vector<8x1xf32>
    %24 = arith.addf %9, %23 : vector<8x1xf32>
    %25 = math.log %21 : vector<8x1xf32>
    %26 = arith.addf %9, %25 : vector<8x1xf32>
    %cst_8 = arith.constant 0.000000e+00 : f32
    %27 = vector.broadcast %cst_8 : f32 to vector<8x16xf32>
    %28 = arith.select %7, %1, %27 : vector<8x16xi1>, vector<8x16xf32>
    %29 = vector.broadcast %24 : vector<8x1xf32> to vector<8x16xf32>
    %30 = arith.subf %0, %29 : vector<8x16xf32>
    %31 = arith.mulf %30, %28 : vector<8x16xf32>
    %cst_9 = arith.constant dense<0.000000e+00> : vector<8xf32>
    %32 = vector.multi_reduction <add>, %31, %cst_9 [1] : vector<8x16xf32> to vector<8xf32>
    %33 = vector.shape_cast %32 : vector<8xf32> to vector<8x1xf32>
    %cst_10 = arith.constant 0.000000e+00 : f32
    %34 = vector.broadcast %cst_10 : f32 to vector<8x1xf32>
    %35 = arith.subf %34, %33 : vector<8x1xf32>
    %36 = vector.extract_strided_slice %0 {offsets = [0, 0], sizes = [8, 1], strides = [1, 1]} : vector<8x16xf32> to vector<8x1xf32>
    %37 = arith.subf %26, %36 : vector<8x1xf32>
    %38 = arith.addf %35, %37 : vector<8x1xf32>
    %39 = tpu.iota {dimensions = array<i32: 0>} : vector<8x1xi32>
    %c8_i32 = arith.constant 8 : i32
    %40 = arith.muli %arg0, %c8_i32 : i32
    %41 = vector.broadcast %40 : i32 to vector<8x1xi32>
    %42 = arith.addi %39, %41 : vector<8x1xi32>
    %c16_i32 = arith.constant 16 : i32
    %43 = vector.broadcast %c16_i32 : i32 to vector<8x1xi32>
    %44 = arith.cmpi slt, %42, %43 : vector<8x1xi32>
    %cst_11 = arith.constant 0.000000e+00 : f32
    %45 = vector.broadcast %cst_11 : f32 to vector<8x1xf32>
    %46 = arith.select %44, %38, %45 : vector<8x1xi1>, vector<8x1xf32>
    %47 = vector.shape_cast %46 : vector<8x1xf32> to vector<1x8x1xf32>
    %cst_12 = arith.constant dense<0.000000e+00> : vector<1xf32>
    %48 = vector.multi_reduction <add>, %47, %cst_12 [1, 2] : vector<1x8x1xf32> to vector<1xf32>
    %49 = vector.shape_cast %48 : vector<1xf32> to vector<1x1x1xf32>
    %50 = vector.extract %49[0, 0, 0] : f32 from vector<1x1x1xf32>
    %51 = vector.broadcast %50 : f32 to vector<1x8x128xf32>
    %c0_13 = arith.constant 0 : index
    %c0_14 = arith.constant 0 : index
    %c0_15 = arith.constant 0 : index
    %52 = vector.load %arg3[%c0_13, %c0_14, %c0_15] : memref<1x8x128xf32, #tpu.memory_space<vmem>>, vector<1x8x128xf32>
    tpu.vector_store %arg3[%c0_13, %c0_14, %c0_15], %51 {strides = array<i32>} : memref<1x8x128xf32, #tpu.memory_space<vmem>>, vector<1x8x128xf32>,
    return
  }
  func.func @transform_0(%arg0: i32) -> (i32, i32) {
    %c0_i32 = arith.constant 0 : i32
    %c0_i32_0 = arith.constant 0 : i32
    return %arg0, %c0_i32 : i32, i32
  }
  func.func @transform_1(%arg0: i32) -> (i32, i32) {
    %c0_i32 = arith.constant 0 : i32
    %c0_i32_0 = arith.constant 0 : i32
    return %arg0, %c0_i32 : i32, i32
  }
  func.func @transform_2(%arg0: i32) -> (i32, i32, i32) {
    %c0_i32 = arith.constant 0 : i32
    %c0_i32_0 = arith.constant 0 : i32
    %c0_i32_1 = arith.constant 0 : i32
    return %arg0, %c0_i32, %c0_i32_0 : i32, i32, i32
  }
}

</mosaic_0001>

<llo_original>
// kernel: tpu_custom_call.1
$region0: #{tpu_custom_call.1}
  #allocation0 [shape = 'u32[]', space=smem, size = 0x4, offset = 0x4, fixed_abs, tag = 'smem constant byte address 0x4 - core index']
  #allocation1 [shape = 'u32[144,128]{1,0:T(1,128)}', space=vmem, size = 0x12000, scoped, tag = 'internal scratch']
  %s0 = inlined_call_operand.hbm [shape: f32[16,16], index: 0, kind: input, shape index: {}]
  %s1 = inlined_call_operand.hbm [shape: f32[16,16], index: 1, kind: input, shape index: {}]
  %s2 = inlined_call_operand.hbm [shape: f32[2,8,128], index: 2, kind: output, shape index: {}]
  %s3 = sld [smem:[#allocation0]]
  $region49: #{tpu_custom_call.1} parent=0
    _
  %s5 = ssub.s32 1, %s3
  %s6 = scalar_select 0, %s5, %s3
  $region1: #{tpu_custom_call.1} parent=0
    #allocation2 [shape = 'u8[8192]{0}', space=vmem, size = 0x2000, scoped, tag = 'input window, operand 0']
    #allocation3 [shape = 's32[2]{0}', space=sflag, size = 0x8, scoped, tag = 'scoped memory for tpu_custom_call.1']
    #allocation4 [shape = 's32[2]{0}', space=sflag, size = 0x8, scoped, tag = 'scoped memory for tpu_custom_call.1']
    #allocation5 [shape = 'u8[8192]{0}', space=vmem, size = 0x2000, scoped, tag = 'input window, operand 1']
    #allocation6 [shape = 's32[2]{0}', space=sflag, size = 0x8, scoped, tag = 'scoped memory for tpu_custom_call.1']
    #allocation7 [shape = 'u8[8192]{0}', space=vmem, size = 0x2000, scoped, tag = 'output window, operand 0']
    %7 = vsyncpa [#allocation3], 0
    %s8 = scalar_lea.sflag [#allocation3], 1
    %9 = vsyncpa %s8, 0
    %10 = vsyncpa [#allocation6], 0
    %s11 = scalar_lea.sflag [#allocation6], 1
    %12 = vsyncpa %s11, 0
    %13 = vsyncpa [#allocation4], 0
    %s14 = scalar_lea.sflag [#allocation4], 1
    %15 = vsyncpa %s14, 0
    loop: start=0, step=1, limit=4
    $region2: #{tpu_custom_call.1} parent=1 // loop_pre_header
      _
    $region3: #{tpu_custom_call.1} parent=1 // loop_header
      %s17 = sphi 0, %s21
      %p18 = scmp.ge.s32.totalorder %s17, 4
      %s27 = sphi 0, %s29
      %s30 = sphi 0, %s27
      %s31 = sphi 0, %s30
      %s47 = sphi 0, %s31
      %s53 = sphi 0, %s55
      %s56 = sphi 0, %s53
      %s57 = sphi 0, %s56
      %s73 = sphi 0, %s57
      %s79 = sphi 0, %s81
      %s82 = sphi 0, %s79
      %s83 = sphi 0, %s82
      %s99 = sphi 0, %s83
    $region4: #{tpu_custom_call.1} parent=1 // loop_header_branch
      %20 = sbr.rel (%p18) target = $region8
    $region5: #{tpu_custom_call.1} parent=1 // loop_body
      %s22 = ssub.s32 %s17, 1
      %s23 = ssub.s32 %s17, 2
      %s24 = sadd.s32 %s17, 1
      %s25 = ssub.s32 %s17, %s24
      %p26 = scmp.eq.s32.totalorder %s25, 0
      %s28 = sadd.s32 %s27, 1
      %s29 = scalar_select %p26, %s27, %s28
      %p32 = pneg %p26
      %p33 = scmp.eq.s32.totalorder %s17, 1
      %p34 = por %p32, %p33
      %p35 = scmp.ne.s32.totalorder %s27, %s30
      %p36 = scmp.eq.s32.totalorder %s17, 0
      %p37 = por %p35, %p36
      %p38 = scmp.ne.s32.totalorder %s27, %s30
      %p39 = scmp.eq.s32.totalorder %s22, 1
      %p40 = por %p38, %p39
      %p41 = scmp.ne.s32.totalorder %s30, %s31
      %p42 = scmp.eq.s32.totalorder %s22, 0
      %p43 = por %p41, %p42
      %p44 = scmp.ne.s32.totalorder %s30, %s31
      %p45 = scmp.eq.s32.totalorder %s23, 1
      %p46 = por %p44, %p45
      %p48 = scmp.ne.s32.totalorder %s31, %s47
      %p49 = scmp.eq.s32.totalorder %s23, 0
      %p50 = por %p48, %p49
      %s51 = ssub.s32 %s17, %s24
      %p52 = scmp.eq.s32.totalorder %s51, 0
      %s54 = sadd.s32 %s53, 1
      %s55 = scalar_select %p52, %s53, %s54
      %p58 = pneg %p52
      %p59 = scmp.eq.s32.totalorder %s17, 1
      %p60 = por %p58, %p59
      %p61 = scmp.ne.s32.totalorder %s53, %s56
      %p62 = scmp.eq.s32.totalorder %s17, 0
      %p63 = por %p61, %p62
      %p64 = scmp.ne.s32.totalorder %s53, %s56
      %p65 = scmp.eq.s32.totalorder %s22, 1
      %p66 = por %p64, %p65
      %p67 = scmp.ne.s32.totalorder %s56, %s57
      %p68 = scmp.eq.s32.totalorder %s22, 0
      %p69 = por %p67, %p68
      %p70 = scmp.ne.s32.totalorder %s56, %s57
      %p71 = scmp.eq.s32.totalorder %s23, 1
      %p72 = por %p70, %p71
      %p74 = scmp.ne.s32.totalorder %s57, %s73
      %p75 = scmp.eq.s32.totalorder %s23, 0
      %p76 = por %p74, %p75
      %s77 = ssub.s32 %s17, %s24
      %p78 = scmp.eq.s32.totalorder %s77, 0
      %s80 = sadd.s32 %s79, 1
      %s81 = scalar_select %p78, %s79, %s80
      %p84 = pneg %p78
      %p85 = scmp.eq.s32.totalorder %s17, 1
      %p86 = por %p84, %p85
      %p87 = scmp.ne.s32.totalorder %s79, %s82
      %p88 = scmp.eq.s32.totalorder %s17, 0
      %p89 = por %p87, %p88
      %p90 = scmp.ne.s32.totalorder %s79, %s82
      %p91 = scmp.eq.s32.totalorder %s22, 1
      %p92 = por %p90, %p91
      %p93 = scmp.ne.s32.totalorder %s82, %s83
      %p94 = scmp.eq.s32.totalorder %s22, 0
      %p95 = por %p93, %p94
      %p96 = scmp.ne.s32.totalorder %s82, %s83
      %p97 = scmp.eq.s32.totalorder %s23, 1
      %p98 = por %p96, %p97
      %p100 = scmp.ne.s32.totalorder %s83, %s99
      %p101 = scmp.eq.s32.totalorder %s23, 0
      %p102 = por %p100, %p101
      %p103 = scmp.le.s32.totalorder 1, %s17
      %p104 = scmp.lt.s32.totalorder %s17, 3
      %p105 = pnand %p103, %p104
      %p106 = pneg %p105
      // Predicated region
      $region9: #{tpu_custom_call.1} parent=5 // pred_check
        _
      $region10: #{tpu_custom_call.1} parent=5 // pred_check_branch
        %108 = sbr.rel (%p105) target = $region12
      $region11: #{tpu_custom_call.1} parent=5 // pred_region
        %s109 = ssub.s32 %s17, 1
      $region12: #{tpu_custom_call.1} parent=5 // pred_fallthru
        _
      %p110 = scmp.lt.s32.totalorder %s17, 2
      // Predicated region
      $region13: #{tpu_custom_call.1} parent=5 // pred_check
        %p111 = pneg %p110
      $region14: #{tpu_custom_call.1} parent=5 // pred_check_branch
        %113 = sbr.rel (%p111) target = $region16
      $region15: #{tpu_custom_call.1} parent=5 // pred_region
        // Predicated region
        $region17: #{tpu_custom_call.1} parent=15 // pred_check
          %p114 = pneg %p37
        $region18: #{tpu_custom_call.1} parent=15 // pred_check_branch
          %116 = sbr.rel (%p114) target = $region20
        $region19: #{tpu_custom_call.1} parent=15 // pred_region
          %s117 = sand.u32 %s27, 1
          %s118 = scalar_lea.sflag [#allocation3], %s117
          %s119 = sand.u32 %s27, 1
          %s120 = smul.addr %s119, 8
          %s121 = scalar_lea.vmem [#allocation2], %s120
          %s123 = ssub.s32 128, 128
          %124 = vsyncadd %s118, %s123
          %s125 = smul.addr %s17, 128
          %s126 = scalar_lea.hbm %s0, %s125
          %s128 = sshll.u32 %s121, 4
          %s129 = int_to_ptr.vmem [resolvable:$true] %s128
          %131 = dma.hbm_to_vmem [thread:$0]  %s126, 128, %s129, %s118
        $region20: #{tpu_custom_call.1} parent=15 // pred_fallthru
          _
        // Predicated region
        $region21: #{tpu_custom_call.1} parent=15 // pred_check
          %p132 = pneg %p63
        $region22: #{tpu_custom_call.1} parent=15 // pred_check_branch
          %134 = sbr.rel (%p132) target = $region24
        $region23: #{tpu_custom_call.1} parent=15 // pred_region
          %s135 = sand.u32 %s53, 1
          %s136 = scalar_lea.sflag [#allocation6], %s135
          %s137 = sand.u32 %s53, 1
          %s138 = smul.addr %s137, 8
          %s139 = scalar_lea.vmem [#allocation5], %s138
          %s141 = ssub.s32 128, 128
          %142 = vsyncadd %s136, %s141
          %s143 = smul.addr %s17, 128
          %s144 = scalar_lea.hbm %s1, %s143
          %s146 = sshll.u32 %s139, 4
          %s147 = int_to_ptr.vmem [resolvable:$true] %s146
          %149 = dma.hbm_to_vmem [thread:$0]  %s144, 128, %s147, %s136
        $region24: #{tpu_custom_call.1} parent=15 // pred_fallthru
          _
      $region16: #{tpu_custom_call.1} parent=5 // pred_fallthru
        _
      %p150 = scmp.le.s32.totalorder 1, %s17
      %p151 = scmp.lt.s32.totalorder %s17, 3
      %p152 = pnand %p150, %p151
      %p153 = pneg %p152
      // Predicated region
      $region25: #{tpu_custom_call.1} parent=5 // pred_check
        _
      $region26: #{tpu_custom_call.1} parent=5 // pred_check_branch
        %155 = sbr.rel (%p152) target = $region28
      $region27: #{tpu_custom_call.1} parent=5 // pred_region
        %s156 = ssub.s32 %s17, 1
        %s157 = sand.u32 %s30, 1
        %s158 = scalar_lea.sflag [#allocation3], %s157
        %s159 = sand.u32 %s30, 1
        %s160 = smul.addr %s159, 8
        %s161 = scalar_lea.vmem [#allocation2], %s160
        // Predicated region
        $region29: #{tpu_custom_call.1} parent=27 // pred_check
          %p162 = pneg %p43
        $region30: #{tpu_custom_call.1} parent=27 // pred_check_branch
          %164 = sbr.rel (%p162) target = $region32
        $region31: #{tpu_custom_call.1} parent=27 // pred_region
          %165 = dma.done %s158, 128
        $region32: #{tpu_custom_call.1} parent=27 // pred_fallthru
          _
        %s166 = sand.u32 %s56, 1
        %s167 = scalar_lea.sflag [#allocation6], %s166
        %s168 = sand.u32 %s56, 1
        %s169 = smul.addr %s168, 8
        %s170 = scalar_lea.vmem [#allocation5], %s169
        // Predicated region
        $region33: #{tpu_custom_call.1} parent=27 // pred_check
          %p171 = pneg %p69
        $region34: #{tpu_custom_call.1} parent=27 // pred_check_branch
          %173 = sbr.rel (%p171) target = $region36
        $region35: #{tpu_custom_call.1} parent=27 // pred_region
          %174 = dma.done %s167, 128
        $region36: #{tpu_custom_call.1} parent=27 // pred_fallthru
          _
        %s175 = sand.u32 %s30, 1
        %s176 = scalar_lea.sflag [#allocation3], %s175
        %s177 = sand.u32 %s30, 1
        %s178 = smul.addr %s177, 8
        %s179 = scalar_lea.vmem [#allocation2], %s178
        %p180 = pneg %p43
        %p181 = pneg %p40
        %s182 = sand.u32 %s56, 1
        %s183 = scalar_lea.sflag [#allocation6], %s182
        %s184 = sand.u32 %s56, 1
        %s185 = smul.addr %s184, 8
        %s186 = scalar_lea.vmem [#allocation5], %s185
        %p187 = pneg %p69
        %p188 = pneg %p66
        %p189 = pneg %p95
        %p190 = pneg %p92
        %s191 = sand.u32 %s82, 1
        %s192 = scalar_lea.sflag [#allocation4], %s191
        %s193 = sand.u32 %s82, 1
        %s194 = smul.addr %s193, 8
        %s195 = scalar_lea.vmem [#allocation7], %s194
        %v196 = vld [vmem:[%s161] sm:$0xff]
        %v197 = vld [vmem:[%s170] sm:$0xff]
        %v198 = vlaneseq
        %v199 = vand.u32 %v198, 127
        %vm200 = vcmp.ne.s32.totalorder %v199, 0
        %vm201 = vcmp.gt.f32.partialorder %v197, 0.0
        %vm202 = vmand %vm201, %vm200
        %vm203 = vcmask 130048
        %v204 = vsel %vm203, %v196, -inf
        %205 = vmax.xlane.f32.xlu0 %v204
        %v206 = vpop.xlane.xlu0 %205
        %v207 = vsub.f32 %v196, %v206
        %v208 = vmul.f32 %v207, 1.442695
        %v209 = vpow.pop %v208
        %v210 = vsel %vm202, %v209, 0.0
        %v211 = vsel %vm203, %v210, 0.0
        %212 = vadd.xlane.f32.xlu0 %v211
        %v213 = vpop.xlane.xlu0 %212
        %v214 = vsel %vm202, 0.0, %v209
        %v215 = vsel %vm203, %v214, 0.0
        %216 = vadd.xlane.f32.xlu0 %v215
        %v217 = vpop.xlane.xlu0 %216
        %v218 = vadd.f32 %v213, %v209
        %v219 = vlog2.pop %v218
        %v220 = vmul.f32 %v219, 0.6931472
        %v221 = vadd.f32 %v206, %v220
        %v222 = vlog2.pop %v217
        %v223 = vmul.f32 %v222, 0.6931472
        %v224 = vadd.f32 %v206, %v223
        %v225 = vsel %vm202, %v197, 0.0
        %227 = vset.pattern.permute.xlu0 0
        %228 = vperm.xlu0 %227, %v221
        %v229 = vpop.permute.xlu0 %228
        %v231 = vsub.f32 %v196, %v229
        %v232 = vmul.f32 %v231, %v225
        %v233 = vsel %vm203, %v232, 0.0
        %234 = vadd.xlane.f32.xlu0 %v233
        %v235 = vpop.xlane.xlu0 %234
        %v236 = vsub.f32 0.0, %v235
        %v237 = vsub.f32 %v224, %v196
        %v238 = vadd.f32 %v236, %v237
        %v239 = vlaneseq
        %v240 = vshrl.u32 %v239, 7
        %s241 = smul.u32 %s22, 8
        %v242 = vstv %s241
        %v243 = vadd.s32 %v240, %v242
        %vm244 = vcmp.lt.s32.totalorder %v243, 16
        %v245 = vsel %vm244, %v238, 0.0
        %vm246 = vcmask 7168
        %v247 = vsel %vm246, %v245, 0.0
        %248 = vadd.xlane.f32.xlu0 %v247
        %v249 = vpop.xlane.xlu0 %248
        %v250 = vrot.slane %v249, 4
        %v251 = vadd.f32 %v249, %v250
        %v252 = vrot.slane %v251, 2
        %v253 = vadd.f32 %v251, %v252
        %v254 = vrot.slane %v253, 1
        %v255 = vadd.f32 %v253, %v254
        %s256 = vtos %v255
        %v257 = vstv %s256
        %258 = vst [vmem:[%s195] sm:$0xff] %v257
        %s259 = sand.u32 %s82, 1
        %s260 = scalar_lea.sflag [#allocation4], %s259
        %s261 = sand.u32 %s82, 1
        %s262 = smul.addr %s261, 8
        %s263 = scalar_lea.vmem [#allocation7], %s262
        // Predicated region
        $region37: #{tpu_custom_call.1} parent=27 // pred_check
          %p264 = pneg %p92
        $region38: #{tpu_custom_call.1} parent=27 // pred_check_branch
          %266 = sbr.rel (%p264) target = $region40
        $region39: #{tpu_custom_call.1} parent=27 // pred_region
          %s268 = ssub.s32 128, 128
          %269 = vsyncadd %s260, %s268
          %s270 = smul.addr %s22, 128
          %s271 = scalar_lea.hbm %s2, %s270
          %s273 = sshll.u32 %s263, 4
          %s274 = int_to_ptr.vmem [resolvable:$true] %s273
          %276 = dma.vmem_to_hbm [thread:$0]  %s274, 128, %s271, %s260
        $region40: #{tpu_custom_call.1} parent=27 // pred_fallthru
          _
      $region28: #{tpu_custom_call.1} parent=5 // pred_fallthru
        _
      %p277 = scmp.le.s32.totalorder 2, %s17
      // Predicated region
      $region41: #{tpu_custom_call.1} parent=5 // pred_check
        %p278 = pneg %p277
      $region42: #{tpu_custom_call.1} parent=5 // pred_check_branch
        %280 = sbr.rel (%p278) target = $region44
      $region43: #{tpu_custom_call.1} parent=5 // pred_region
        %s281 = ssub.s32 %s17, 2
        // Predicated region
        $region45: #{tpu_custom_call.1} parent=43 // pred_check
          %p282 = pneg %p98
        $region46: #{tpu_custom_call.1} parent=43 // pred_check_branch
          %284 = sbr.rel (%p282) target = $region48
        $region47: #{tpu_custom_call.1} parent=43 // pred_region
          %s285 = sand.u32 %s83, 1
          %s286 = scalar_lea.sflag [#allocation4], %s285
          %s287 = sand.u32 %s83, 1
          %s288 = smul.addr %s287, 8
          %s289 = scalar_lea.vmem [#allocation7], %s288
          %290 = dma.done %s286, 128
        $region48: #{tpu_custom_call.1} parent=43 // pred_fallthru
          _
      $region44: #{tpu_custom_call.1} parent=5 // pred_fallthru
        _
    $region6: #{tpu_custom_call.1} parent=1 // loop_footer
      %s21 = sadd.s32 1, %s17
    $region7: #{tpu_custom_call.1} parent=1 // loop_footer_branch
      %16 = sbr.rel target = $region3
    $region8: #{tpu_custom_call.1} parent=1 // loop_exit
      _
    %291 = vsyncpa [#allocation3], 1
    %s292 = scalar_lea.sflag [#allocation3], 1
    %293 = vsyncpa %s292, 1
    %294 = vsyncpa [#allocation6], 1
    %s295 = scalar_lea.sflag [#allocation6], 1
    %296 = vsyncpa %s295, 1
    %297 = vsyncpa [#allocation4], 1
    %s298 = scalar_lea.sflag [#allocation4], 1
    %299 = vsyncpa %s298, 1

</llo_original>
